<compile_context>
chip_gen: v5e
topology: v5e:2x2
jax: 0.10.0
libtpu: 0.0.40
codegen_flags: <defaults>
</compile_context>

<pallas_src>
import jax
import jax.numpy as jnp
from jax.experimental import pallas as pl
from jax.experimental.pallas import tpu as pltpu


def _round_up(x, m):
    return ((x + m - 1) // m) * m


def _nb_head_kernel(x_ref, w_ref, b_ref, o_ref, acc_ref):
    # x_ref: (tm, tk) VMEM, w_ref: (tk, 1) VMEM, b_ref: (1, 1) SMEM,
    # o_ref: (tm, 1) VMEM (resident across the K axis), acc_ref: (tm, 1) f32.
    k = pl.program_id(1)

    @pl.when(k == 0)
    def _():
        acc_ref[...] = jnp.zeros_like(acc_ref)

    # MXU matmul with f32 accumulation.  N=1 under-utilizes MXU columns, but
    # the kernel is HBM-bound on reading x, so the compute unit choice is not
    # on the critical path.
    acc_ref[...] += jnp.dot(x_ref[...], w_ref[...],
                            preferred_element_type=jnp.float32)

    @pl.when(k == pl.num_programs(1) - 1)
    def _():
        o_ref[...] = (acc_ref[...] + b_ref[0, 0]).astype(o_ref.dtype)


def _pick_tk(d, max_tk=2048):
    """Feature-dim tile: full D when small/unaligned, else a 128-multiple divisor."""
    if d <= max_tk or d % 128 != 0:
        return d
    tk = max_tk - (max_tk % 128)
    while tk >= 128:
        if d % tk == 0:
            return tk
        tk -= 128
    return d


def _pick_tm(tm_req, m, tk, itemsize, x_dbuf_budget_bytes=16 * 1024 * 1024):
    """Row tile: as large as requested, capped by the (padded) row count and by
    the VMEM budget for the double-buffered x tile."""
    tm = max(8, min(_round_up(tm_req, 8), _round_up(m, 8)))
    while tm > 8 and 2 * tm * tk * itemsize > x_dbuf_budget_bytes:
        tm = _round_up(max(tm // 2, 8), 8)
    return tm


def negative_binomial_head_forward(x, weight, bias, *, tm=1024):
    """log_mu = x @ weight.T + bias with weight (1, D), bias (1,), like nn.Linear."""
    orig_shape = x.shape
    D = orig_shape[-1]
    x2 = x.reshape(-1, D)          # keep the caller's dtype (bf16 stays bf16)
    M = x2.shape[0]

    tk = _pick_tk(D)
    tm_eff = _pick_tm(tm, M, tk, x2.dtype.itemsize)

    # Pad rows so the grid covers M exactly (no divisibility requirement).
    M_pad = _round_up(M, tm_eff)
    if M_pad != M:
        x2 = jnp.pad(x2, ((0, M_pad - M), (0, 0)))

    w_col = weight.reshape(D, 1).astype(x2.dtype)    # resident (D, 1) operand
    b_sc = bias.reshape(1, 1).astype(jnp.float32)    # scalar bias -> SMEM

    grid = (M_pad // tm_eff, D // tk)

    out = pl.pallas_call(
        _nb_head_kernel,
        out_shape=jax.ShapeDtypeStruct((M_pad, 1), x.dtype),
        grid_spec=pltpu.PrefetchScalarGridSpec(
            num_scalar_prefetch=0,
            grid=grid,
            in_specs=[
                pl.BlockSpec((tm_eff, tk), lambda i, k: (i, k)),    # x tile
                pl.BlockSpec((tk, 1), lambda i, k: (k, 0)),         # weight col
                pl.BlockSpec(memory_space=pltpu.MemorySpace.SMEM),  # bias scalar
            ],
            out_specs=pl.BlockSpec((tm_eff, 1), lambda i, k: (i, 0)),
            scratch_shapes=[pltpu.VMEM((tm_eff, 1), jnp.float32)],
        ),
        compiler_params=pltpu.CompilerParams(
            dimension_semantics=("parallel", "arbitrary"),
            vmem_limit_bytes=32 * 1024 * 1024,
        ),
    )(x2, w_col, b_sc)

    out = out[:M]
    return out.reshape(*orig_shape[:-1], 1)


if __name__ == "__main__":
    key = jax.random.PRNGKey(0)

    def run_case(batch, seq, input_dim, k):
        kx, kw, kb = jax.random.split(k, 3)
        x = jax.random.normal(kx, (batch, seq, input_dim), dtype=jnp.float32)
        bound = 1.0 / (input_dim ** 0.5)
        weight = jax.random.uniform(kw, (1, input_dim), dtype=jnp.float32,
                                    minval=-bound, maxval=bound)
        bias = jax.random.uniform(kb, (1,), dtype=jnp.float32,
                                  minval=-bound, maxval=bound)

        log_mu = negative_binomial_head_forward(x, weight, bias)
        log_mu = jax.block_until_ready(log_mu)

        ref = x @ weight.T + bias   # same semantics as torch nn.Linear
        assert log_mu.shape == (batch, seq, 1), log_mu.shape
        assert jnp.allclose(log_mu, ref, atol=1e-5, rtol=1e-5), "mismatch vs reference"

    k0, k1 = jax.random.split(key)
    # Shapes implied by the module: x is (batch, seq, input_dim).
    run_case(batch=2, seq=8, input_dim=32, k=k0)
    # Exercise the padding path (rows not a multiple of 8, unaligned D).
    run_case(batch=3, seq=5, input_dim=20, k=k1)

    # TODO(synk): nb_loss / loss are training-time utilities, not part of forward.
    print("KERNEL_OK")
</pallas_src>

<mosaic_0001>
module attributes {stable_mosaic.version = 11 : i64} {
  func.func @_nb_head_kernel(%arg0: i32, %arg1: i32, %arg2: memref<16x32xf32, #tpu.memory_space<vmem>>, %arg3: memref<32x1xf32, #tpu.memory_space<vmem>>, %arg4: memref<1x1xf32, #tpu.memory_space<smem>>, %arg5: memref<16x1xf32, #tpu.memory_space<vmem>>, %arg6: memref<16x1xf32, #tpu.memory_space<vmem>>) attributes {dimension_semantics = [#tpu.dimension_semantics<parallel>, #tpu.dimension_semantics<arbitrary>], iteration_bounds = array<i64: 1, 1>, scalar_prefetch = 0 : i64, scratch_operands = 1 : i64, tpu.core_type = #tpu.core_type<tc>, window_params = [{transform_indices = @transform_0, window_bounds = array<i64: 16, 32>}, {transform_indices = @transform_1, window_bounds = array<i64: 32, 1>}, {transform_indices = @transform_2, window_bounds = array<i64: 1, 1>}, {transform_indices = @transform_3, window_bounds = array<i64: 16, 1>}]} {
    %c0_i32 = arith.constant 0 : i32
    %0 = arith.cmpi eq, %arg1, %c0_i32 : i32
    %1 = arith.extui %0 : i1 to i32
    %c0_i32_0 = arith.constant 0 : i32
    %2 = arith.cmpi ne, %1, %c0_i32_0 : i32
    scf.if %2 {
      %cst_10 = arith.constant 0.000000e+00 : f32
      %12 = vector.broadcast %cst_10 : f32 to vector<16x1xf32>
      %c0_11 = arith.constant 0 : index
      %c0_12 = arith.constant 0 : index
      %13 = vector.load %arg6[%c0_11, %c0_12] : memref<16x1xf32, #tpu.memory_space<vmem>>, vector<16x1xf32>
      tpu.vector_store %arg6[%c0_11, %c0_12], %12 {strides = array<i32>} : memref<16x1xf32, #tpu.memory_space<vmem>>, vector<16x1xf32>,
    } else {
    }
    %c0 = arith.constant 0 : index
    %c0_1 = arith.constant 0 : index
    %3 = vector.load %arg6[%c0, %c0_1] : memref<16x1xf32, #tpu.memory_space<vmem>>, vector<16x1xf32>
    %c0_2 = arith.constant 0 : index
    %c0_3 = arith.constant 0 : index
    %4 = vector.load %arg2[%c0_2, %c0_3] : memref<16x32xf32, #tpu.memory_space<vmem>>, vector<16x32xf32>
    %c0_4 = arith.constant 0 : index
    %c0_5 = arith.constant 0 : index
    %5 = vector.load %arg3[%c0_4, %c0_5] : memref<32x1xf32, #tpu.memory_space<vmem>>, vector<32x1xf32>
    %cst = arith.constant dense<0.000000e+00> : vector<16x1xf32>
    %6 = tpu.matmul %4, %5, %cst {dimension_numbers = #tpu.dot_dimension_numbers<[1], [0], [0], [1], [0, 0, 1, 1], [], []>} : vector<16x32xf32>, vector<32x1xf32>, vector<16x1xf32> -> vector<16x1xf32>
    %7 = arith.addf %3, %6 : vector<16x1xf32>
    %c0_6 = arith.constant 0 : index
    %c0_7 = arith.constant 0 : index
    %8 = vector.load %arg6[%c0_6, %c0_7] : memref<16x1xf32, #tpu.memory_space<vmem>>, vector<16x1xf32>
    tpu.vector_store %arg6[%c0_6, %c0_7], %7 {strides = array<i32>} : memref<16x1xf32, #tpu.memory_space<vmem>>, vector<16x1xf32>,
    %c0_i32_8 = arith.constant 0 : i32
    %9 = arith.cmpi eq, %arg1, %c0_i32_8 : i32
    %10 = arith.extui %9 : i1 to i32
    %c0_i32_9 = arith.constant 0 : i32
    %11 = arith.cmpi ne, %10, %c0_i32_9 : i32
    scf.if %11 {
      %c0_10 = arith.constant 0 : index
      %c0_11 = arith.constant 0 : index
      %12 = vector.load %arg6[%c0_10, %c0_11] : memref<16x1xf32, #tpu.memory_space<vmem>>, vector<16x1xf32>
      %c0_12 = arith.constant 0 : index
      %c0_13 = arith.constant 0 : index
      %13 = memref.load %arg4[%c0_12, %c0_13] : memref<1x1xf32, #tpu.memory_space<smem>>
      %14 = vector.broadcast %13 : f32 to vector<16x1xf32>
      %15 = arith.addf %12, %14 : vector<16x1xf32>
      %c0_14 = arith.constant 0 : index
      %c0_15 = arith.constant 0 : index
      %16 = vector.load %arg5[%c0_14, %c0_15] : memref<16x1xf32, #tpu.memory_space<vmem>>, vector<16x1xf32>
      tpu.vector_store %arg5[%c0_14, %c0_15], %15 {strides = array<i32>} : memref<16x1xf32, #tpu.memory_space<vmem>>, vector<16x1xf32>,
    } else {
    }
    return
  }
  func.func @transform_0(%arg0: i32, %arg1: i32) -> (i32, i32) {
    %c0_i32 = arith.constant 0 : i32
    return %arg0, %arg1 : i32, i32
  }
  func.func @transform_1(%arg0: i32, %arg1: i32) -> (i32, i32) {
    %c0_i32 = arith.constant 0 : i32
    %c0_i32_0 = arith.constant 0 : i32
    return %arg1, %c0_i32 : i32, i32
  }
  func.func @transform_2(%arg0: i32, %arg1: i32) -> (i32, i32) {
    %c0_i32 = arith.constant 0 : i32
    %c0_i32_0 = arith.constant 0 : i32
    %c0_i32_1 = arith.constant 0 : i32
    return %c0_i32, %c0_i32_0 : i32, i32
  }
  func.func @transform_3(%arg0: i32, %arg1: i32) -> (i32, i32) {
    %c0_i32 = arith.constant 0 : i32
    %c0_i32_0 = arith.constant 0 : i32
    return %arg0, %c0_i32 : i32, i32
  }
}

</mosaic_0001>

<llo_original>
// kernel: tpu_custom_call.1
$region0: #{tpu_custom_call.1}
  #allocation0 [shape = 'u32[]', space=smem, size = 0x4, offset = 0x4, fixed_abs, tag = 'smem constant byte address 0x4 - core index']
  #allocation1 [shape = 'u32[72,128]{1,0:T(1,128)}', space=vmem, size = 0x9000, scoped, tag = 'internal scratch']
  #allocation2 [shape = 'f32[16,1]{1,0:T(8,128)}', space=vmem, size = 0x2000, scoped, tag = 'scratch operand']
  #allocation3 [shape = 'f32[1,1]{1,0:T(1,128)S(6)}', space=smem, size = 0x200, scoped, tag = 'scoped memory for tpu_custom_call.1']
  %s0 = inlined_call_operand.vmem [shape: f32[16,32], index: 0, kind: input, shape index: {}]
  %s1 = inlined_call_operand.vmem [shape: f32[32,1], index: 1, kind: input, shape index: {}]
  %s2 = inlined_call_operand.<no memory space> [shape: f32[1,1], index: 2, kind: input, shape index: {}]
  %s3 = inlined_call_operand.vmem [shape: f32[16,1], index: 3, kind: output, shape index: {}]
  %s4 = sld [smem:[#allocation0]]
  $region30: #{tpu_custom_call.1} parent=0
    _
  %s6 = ssub.s32 1, %s4
  %s7 = scalar_select 0, %s6, %s4
  %8 = sst [smem:[#allocation3]] %s2
  // Predicated region
  $region2: #{tpu_custom_call.1} parent=0 // pred_check
    _
  $region3: #{tpu_custom_call.1} parent=0 // pred_check_branch
    %10 = sbr.rel (0) target = $region5
  $region4: #{tpu_custom_call.1} parent=0 // pred_region
    _
  $region5: #{tpu_custom_call.1} parent=0 // pred_fallthru
    _
  // Predicated region
  $region6: #{tpu_custom_call.1} parent=0 // pred_check
    _
  $region7: #{tpu_custom_call.1} parent=0 // pred_check_branch
    %12 = sbr.rel (0) target = $region9
  $region8: #{tpu_custom_call.1} parent=0 // pred_region
    _
  $region9: #{tpu_custom_call.1} parent=0 // pred_fallthru
    _
  // Predicated region
  $region10: #{tpu_custom_call.1} parent=0 // pred_check
    _
  $region11: #{tpu_custom_call.1} parent=0 // pred_check_branch
    %14 = sbr.rel (0) target = $region13
  $region12: #{tpu_custom_call.1} parent=0 // pred_region
    _
  $region13: #{tpu_custom_call.1} parent=0 // pred_fallthru
    _
  %p15 = scmp.eq.s32.totalorder 0, 0
  // Predicated region
  $region14: #{tpu_custom_call.1} parent=0 // pred_check
    %p16 = pneg %p15
  $region15: #{tpu_custom_call.1} parent=0 // pred_check_branch
    %18 = sbr.rel (%p16) target = $region17
  $region16: #{tpu_custom_call.1} parent=0 // pred_region
    %vm19 = vcmask 7168
    %20 = vst.msk [vmem:[#allocation2] sm:$0xff] %vm19, 0.0
    %21 = vst.msk [vmem:[#allocation2 + $0x8] sm:$0xff] %vm19, 0.0
  $region17: #{tpu_custom_call.1} parent=0 // pred_fallthru
    _
  %v22 = vld [vmem:[#allocation2] sm:$0xff]
  %v23 = vld [vmem:[#allocation2 + $0x8] sm:$0xff]
  %v24 = vld [vmem:[%s0] sm:$0xff]
  %v25 = vld [vmem:[%s0 + $0x8] sm:$0xff]
  %v26 = vld [vmem:[%s1] sm:$0xff]
  %v27 = vld [vmem:[%s1 + $0x8] sm:$0xff]
  %v28 = vld [vmem:[%s1 + $0x10] sm:$0xff]
  %v29 = vld [vmem:[%s1 + $0x18] sm:$0xff]
  %vm30 = vcmask 261120
  %v32 = vsel %vm30, %v24, 0
  %v35 = vsel %vm30, %v25, 0
  %37 = vmatpush.msra.mxu0 0.0
  %38 = vmatpush.msra.mxu0 0.0
  %39 = vmatpush.msra.mxu0 0.0
  %40 = vmatpush.msra.mxu0 0.0
  %41 = vmatpush.msra.mxu0 0.0
  %42 = vmatpush.msra.mxu0 0.0
  %43 = vmatpush.msra.mxu0 0.0
  %44 = vmatpush.msra.mxu0 0.0
  %45 = vmatpush.msra.mxu0 0.0
  %46 = vmatpush.msra.mxu0 0.0
  %47 = vmatpush.msra.mxu0 0.0
  %48 = vmatpush.msra.mxu0 0.0
  %49 = vmatpush.msra.mxu0 %v29
  %50 = vmatpush.msra.mxu0 %v28
  %51 = vmatpush.msra.mxu0 %v27
  %52 = vmatpush.msra.mxu0 %v26
  %53 = vmatmul.f32.gmra.mxu0 %v32
  %v54 = vpop.f32.mrf.mxu0
  %v55 = vadd.f32 0.0, %v54
  %56 = vmatmul.f32.gmra.mxu0 %v35
  %v57 = vpop.f32.mrf.mxu0
  %v58 = vadd.f32 0.0, %v57
  %59 = vdwg.mxu0
  %v60 = vadd.f32 %v22, %v55
  %v61 = vadd.f32 %v23, %v58
  %vm62 = vcmask 7168
  %63 = vst.msk [vmem:[#allocation2] sm:$0xff] %vm62, %v60
  %64 = vst.msk [vmem:[#allocation2 + $0x8] sm:$0xff] %vm62, %v61
  // Predicated region
  $region18: #{tpu_custom_call.1} parent=0 // pred_check
    %p65 = pneg %p15
  $region19: #{tpu_custom_call.1} parent=0 // pred_check_branch
    %67 = sbr.rel (%p65) target = $region21
  $region20: #{tpu_custom_call.1} parent=0 // pred_region
    %v68 = vld [vmem:[#allocation2] sm:$0xff]
    %v69 = vld [vmem:[#allocation2 + $0x8] sm:$0xff]
    %s70 = sld [smem:[#allocation3]]
    %v71 = vstv %s70
    %v72 = vadd.f32 %v68, %v71
    %v73 = vadd.f32 %v69, %v71
    %74 = vst.msk [vmem:[%s3] sm:$0xff] %vm62, %v72
    %75 = vst.msk [vmem:[%s3 + $0x8] sm:$0xff] %vm62, %v73
  $region21: #{tpu_custom_call.1} parent=0 // pred_fallthru
    _
  // Predicated region
  $region22: #{tpu_custom_call.1} parent=0 // pred_check
    _
  $region23: #{tpu_custom_call.1} parent=0 // pred_check_branch
    %77 = sbr.rel (0) target = $region25
  $region24: #{tpu_custom_call.1} parent=0 // pred_region
    _
  $region25: #{tpu_custom_call.1} parent=0 // pred_fallthru
    _
  // Predicated region
  $region26: #{tpu_custom_call.1} parent=0 // pred_check
    _
  $region27: #{tpu_custom_call.1} parent=0 // pred_check_branch
    %79 = sbr.rel (0) target = $region29
  $region28: #{tpu_custom_call.1} parent=0 // pred_region
    _
  $region29: #{tpu_custom_call.1} parent=0 // pred_fallthru
    _

</llo_original>
